<compile_context>
chip_gen: v5e
topology: v5e:2x2
jax: 0.10.0
libtpu: 0.0.40
codegen_flags: <defaults>
</compile_context>

<pallas_src>
import jax
import jax.numpy as jnp
from jax.experimental import pallas as pl
from jax.experimental.pallas import tpu as pltpu

OBS_DIM = 4        # CartPole-v1 observation_space.shape[0]
ACTION_DIM = 1
HIDDEN = 256
MAX_BLOCK_B = 512  # batch rows per grid step


def _round_up(x, m):
    return (x + m - 1) // m * m


def _qnet_kernel(obs_ref, act_ref, w1o_ref, w1a_ref, b1_ref,
                 w2_ref, b2_ref, w3_ref, b3_ref, o_ref):
    obs = obs_ref[...]                       # (TB, OBS_DIM)    f32
    act = act_ref[...]                       # (TB, ACTION_DIM) f32

    # ---- fc1 + ReLU on the VPU: K = obs_dim + action_dim = 5 is far too small
    # for the MXU, so do unrolled broadcast multiply-adds instead.
    h1 = b1_ref[...]                         # (1, HIDDEN) -> broadcasts below
    for k in range(OBS_DIM):
        h1 = h1 + obs[:, k:k + 1] * w1o_ref[k:k + 1, :]
    for k in range(ACTION_DIM):
        h1 = h1 + act[:, k:k + 1] * w1a_ref[k:k + 1, :]
    h1 = jnp.maximum(h1, 0.0)                # (TB, HIDDEN) f32

    # ---- fc2 + ReLU: the only real matmul. bf16 operands -> single MXU pass,
    # f32 accumulation; bias/ReLU stay in f32 (v5e VPU has no bf16 path).
    h2 = jnp.dot(h1.astype(jnp.bfloat16),
                 w2_ref[...].astype(jnp.bfloat16),
                 preferred_element_type=jnp.float32)
    h2 = jnp.maximum(h2 + b2_ref[...], 0.0)  # (TB, HIDDEN) f32

    # ---- fc3 (out_features = 1): VPU multiply + XLU lane reduction instead of
    # an MXU matmul that would use <1% of the output lanes.
    q = jnp.sum(h2 * w3_ref[...], axis=-1, keepdims=True) + b3_ref[...]
    o_ref[...] = q.astype(o_ref.dtype)       # (TB, 1)


def qnetwork_forward(obs, action, params, *, block_b=MAX_BLOCK_B):
    """obs: (B, OBS_DIM), action: (B, ACTION_DIM) -> (B, 1) float32."""
    w1o, w1a, b1, w2, b2, w3, b3 = params
    obs = obs.astype(jnp.float32)
    action = action.astype(jnp.float32)

    B = obs.shape[0]
    tb = min(block_b, _round_up(B, 8))       # batch tile, always a multiple of 8
    Bp = _round_up(B, tb)
    if Bp != B:                              # pad remainder tile
        obs = jnp.pad(obs, ((0, Bp - B), (0, 0)))
        action = jnp.pad(action, ((0, Bp - B), (0, 0)))

    grid = (Bp // tb,)
    resident = lambda i: (0, 0)              # weights/biases stay VMEM-resident

    flops = 2 * Bp * ((OBS_DIM + ACTION_DIM) * HIDDEN + HIDDEN * HIDDEN + HIDDEN)
    bytes_accessed = 4 * (
        Bp * (OBS_DIM + ACTION_DIM + 1)                 # obs/act in, q out
        + (OBS_DIM + ACTION_DIM) * HIDDEN + HIDDEN      # fc1 weights + bias
        + HIDDEN * HIDDEN + HIDDEN                      # fc2 weights + bias
        + HIDDEN + 1                                    # fc3 weights + bias
    )

    out = pl.pallas_call(
        _qnet_kernel,
        out_shape=jax.ShapeDtypeStruct((Bp, 1), jnp.float32),
        grid=grid,
        in_specs=[
            pl.BlockSpec((tb, OBS_DIM), lambda i: (i, 0)),
            pl.BlockSpec((tb, ACTION_DIM), lambda i: (i, 0)),
            pl.BlockSpec((OBS_DIM, HIDDEN), resident),
            pl.BlockSpec((ACTION_DIM, HIDDEN), resident),
            pl.BlockSpec((1, HIDDEN), resident),
            pl.BlockSpec((HIDDEN, HIDDEN), resident),
            pl.BlockSpec((1, HIDDEN), resident),
            pl.BlockSpec((1, HIDDEN), resident),
            pl.BlockSpec((1, 1), resident),
        ],
        out_specs=pl.BlockSpec((tb, 1), lambda i: (i, 0)),
        compiler_params=pltpu.CompilerParams(
            dimension_semantics=("parallel",)),   # v7x: split batch over 2 TCs
        cost_estimate=pl.CostEstimate(
            flops=flops, bytes_accessed=bytes_accessed, transcendentals=0),
    )(obs, action, w1o, w1a, b1, w2, b2, w3, b3)

    return out[:B]


def init_params(key):
    """torch.nn.Linear default init: U(-1/sqrt(fan_in), +1/sqrt(fan_in)).

    Weights stored pre-transposed as (in_features, out_features); fc1's weight is
    split into obs rows / action rows (fused concat), fc3's weight is a (1, HIDDEN)
    row for the VPU/XLU reduction path, b3 is a (1, 1) broadcastable scalar.
    """
    def linear(k, fan_in, fan_out):
        kw, kb = jax.random.split(k)
        bound = 1.0 / float(fan_in) ** 0.5
        w = jax.random.uniform(kw, (fan_in, fan_out), jnp.float32, -bound, bound)
        b = jax.random.uniform(kb, (1, fan_out), jnp.float32, -bound, bound)
        return w, b

    k1, k2, k3 = jax.random.split(key, 3)
    w1, b1 = linear(k1, OBS_DIM + ACTION_DIM, HIDDEN)
    w2, b2 = linear(k2, HIDDEN, HIDDEN)
    w3, b3 = linear(k3, HIDDEN, 1)

    return (w1[:OBS_DIM], w1[OBS_DIM:], b1, w2, b2, w3.T, b3.reshape(1, 1))


def reference_forward_f32(obs, action, params):
    """Pure-f32 JAX mirror of the PyTorch module semantics."""
    w1o, w1a, b1, w2, b2, w3, b3 = params
    x = jnp.concatenate([obs, action], axis=-1)
    w1 = jnp.concatenate([w1o, w1a], axis=0)
    h1 = jnp.maximum(x @ w1 + b1, 0.0)
    h2 = jnp.maximum(h1 @ w2 + b2, 0.0)
    return h2 @ w3.T + b3


def reference_forward_kernel_math(obs, action, params):
    """Same numerics as the kernel (unrolled fc1 FMAs, bf16 fc2, reduce fc3)."""
    w1o, w1a, b1, w2, b2, w3, b3 = params
    x = jnp.concatenate([obs, action], axis=-1)
    w1 = jnp.concatenate([w1o, w1a], axis=0)
    h1 = b1
    for k in range(OBS_DIM + ACTION_DIM):
        h1 = h1 + x[:, k:k + 1] * w1[k:k + 1, :]
    h1 = jnp.maximum(h1, 0.0)
    h2 = jnp.dot(h1.astype(jnp.bfloat16), w2.astype(jnp.bfloat16),
                 preferred_element_type=jnp.float32)
    h2 = jnp.maximum(h2 + b2, 0.0)
    return jnp.sum(h2 * w3, axis=-1, keepdims=True) + b3


if __name__ == "__main__":
    key = jax.random.PRNGKey(0)
    kp, ko, ka = jax.random.split(key, 3)

    params = init_params(kp)

    B = 8
    obs = jax.random.normal(ko, (B, OBS_DIM), jnp.float32)
    action = jax.random.normal(ka, (B, ACTION_DIM), jnp.float32)

    out = jax.block_until_ready(qnetwork_forward(obs, action, params))
    assert out.shape == (B, 1)

    ref_kernel_math = reference_forward_kernel_math(obs, action, params)
    assert jnp.allclose(out, ref_kernel_math, atol=2e-3, rtol=2e-3), \
        "mismatch vs kernel-math reference"

    ref_f32 = reference_forward_f32(obs, action, params)
    assert jnp.allclose(out, ref_f32, atol=5e-2, rtol=5e-2), \
        "mismatch vs f32 reference"

    print("KERNEL_OK")
</pallas_src>

<mosaic_0001>
module attributes {stable_mosaic.version = 11 : i64} {
  func.func @_qnet_kernel(%arg0: i32, %arg1: memref<8x4xf32, #tpu.memory_space<vmem>>, %arg2: memref<8x1xf32, #tpu.memory_space<vmem>>, %arg3: memref<4x256xf32, #tpu.memory_space<vmem>>, %arg4: memref<1x256xf32, #tpu.memory_space<vmem>>, %arg5: memref<1x256xf32, #tpu.memory_space<vmem>>, %arg6: memref<256x256xf32, #tpu.memory_space<vmem>>, %arg7: memref<1x256xf32, #tpu.memory_space<vmem>>, %arg8: memref<1x256xf32, #tpu.memory_space<vmem>>, %arg9: memref<1x1xf32, #tpu.memory_space<vmem>>, %arg10: memref<8x1xf32, #tpu.memory_space<vmem>>) attributes {dimension_semantics = [#tpu.dimension_semantics<parallel>], iteration_bounds = array<i64: 1>, scalar_prefetch = 0 : i64, scratch_operands = 0 : i64, tpu.core_type = #tpu.core_type<tc>, window_params = [{transform_indices = @transform_0, window_bounds = array<i64: 8, 4>}, {transform_indices = @transform_1, window_bounds = array<i64: 8, 1>}, {pipeline_mode = #tpu.pipeline_mode<synchronous>, transform_indices = @transform_2, window_bounds = array<i64: 4, 256>}, {pipeline_mode = #tpu.pipeline_mode<synchronous>, transform_indices = @transform_3, window_bounds = array<i64: 1, 256>}, {pipeline_mode = #tpu.pipeline_mode<synchronous>, transform_indices = @transform_4, window_bounds = array<i64: 1, 256>}, {pipeline_mode = #tpu.pipeline_mode<synchronous>, transform_indices = @transform_5, window_bounds = array<i64: 256, 256>}, {pipeline_mode = #tpu.pipeline_mode<synchronous>, transform_indices = @transform_6, window_bounds = array<i64: 1, 256>}, {pipeline_mode = #tpu.pipeline_mode<synchronous>, transform_indices = @transform_7, window_bounds = array<i64: 1, 256>}, {pipeline_mode = #tpu.pipeline_mode<synchronous>, transform_indices = @transform_8, window_bounds = array<i64: 1, 1>}, {transform_indices = @transform_9, window_bounds = array<i64: 8, 1>}]} {
    %c0 = arith.constant 0 : index
    %c0_0 = arith.constant 0 : index
    %0 = vector.load %arg1[%c0, %c0_0] : memref<8x4xf32, #tpu.memory_space<vmem>>, vector<8x4xf32>
    %c0_1 = arith.constant 0 : index
    %c0_2 = arith.constant 0 : index
    %1 = vector.load %arg2[%c0_1, %c0_2] : memref<8x1xf32, #tpu.memory_space<vmem>>, vector<8x1xf32>
    %c0_3 = arith.constant 0 : index
    %c0_4 = arith.constant 0 : index
    %2 = vector.load %arg5[%c0_3, %c0_4] : memref<1x256xf32, #tpu.memory_space<vmem>>, vector<1x256xf32>
    %3 = vector.extract_strided_slice %0 {offsets = [0, 0], sizes = [8, 1], strides = [1, 1]} : vector<8x4xf32> to vector<8x1xf32>
    %c0_5 = arith.constant 0 : index
    %c0_6 = arith.constant 0 : index
    %4 = vector.load %arg3[%c0_5, %c0_6] : memref<4x256xf32, #tpu.memory_space<vmem>>, vector<1x256xf32>
    %5 = vector.broadcast %3 : vector<8x1xf32> to vector<8x256xf32>
    %6 = vector.broadcast %4 : vector<1x256xf32> to vector<8x256xf32>
    %7 = arith.mulf %5, %6 : vector<8x256xf32>
    %8 = vector.broadcast %2 : vector<1x256xf32> to vector<8x256xf32>
    %9 = arith.addf %8, %7 : vector<8x256xf32>
    %10 = vector.extract_strided_slice %0 {offsets = [0, 1], sizes = [8, 1], strides = [1, 1]} : vector<8x4xf32> to vector<8x1xf32>
    %c1 = arith.constant 1 : index
    %c0_7 = arith.constant 0 : index
    %11 = vector.load %arg3[%c1, %c0_7] : memref<4x256xf32, #tpu.memory_space<vmem>>, vector<1x256xf32>
    %12 = vector.broadcast %10 : vector<8x1xf32> to vector<8x256xf32>
    %13 = vector.broadcast %11 : vector<1x256xf32> to vector<8x256xf32>
    %14 = arith.mulf %12, %13 : vector<8x256xf32>
    %15 = arith.addf %9, %14 : vector<8x256xf32>
    %16 = vector.extract_strided_slice %0 {offsets = [0, 2], sizes = [8, 1], strides = [1, 1]} : vector<8x4xf32> to vector<8x1xf32>
    %c2 = arith.constant 2 : index
    %c0_8 = arith.constant 0 : index
    %17 = vector.load %arg3[%c2, %c0_8] : memref<4x256xf32, #tpu.memory_space<vmem>>, vector<1x256xf32>
    %18 = vector.broadcast %16 : vector<8x1xf32> to vector<8x256xf32>
    %19 = vector.broadcast %17 : vector<1x256xf32> to vector<8x256xf32>
    %20 = arith.mulf %18, %19 : vector<8x256xf32>
    %21 = arith.addf %15, %20 : vector<8x256xf32>
    %22 = vector.extract_strided_slice %0 {offsets = [0, 3], sizes = [8, 1], strides = [1, 1]} : vector<8x4xf32> to vector<8x1xf32>
    %c3 = arith.constant 3 : index
    %c0_9 = arith.constant 0 : index
    %23 = vector.load %arg3[%c3, %c0_9] : memref<4x256xf32, #tpu.memory_space<vmem>>, vector<1x256xf32>
    %24 = vector.broadcast %22 : vector<8x1xf32> to vector<8x256xf32>
    %25 = vector.broadcast %23 : vector<1x256xf32> to vector<8x256xf32>
    %26 = arith.mulf %24, %25 : vector<8x256xf32>
    %27 = arith.addf %21, %26 : vector<8x256xf32>
    %c0_10 = arith.constant 0 : index
    %c0_11 = arith.constant 0 : index
    %28 = vector.load %arg4[%c0_10, %c0_11] : memref<1x256xf32, #tpu.memory_space<vmem>>, vector<1x256xf32>
    %29 = vector.broadcast %1 : vector<8x1xf32> to vector<8x256xf32>
    %30 = vector.broadcast %28 : vector<1x256xf32> to vector<8x256xf32>
    %31 = arith.mulf %29, %30 : vector<8x256xf32>
    %32 = arith.addf %27, %31 : vector<8x256xf32>
    %cst = arith.constant 0.000000e+00 : f32
    %33 = vector.broadcast %cst : f32 to vector<8x256xf32>
    %34 = arith.maximumf %32, %33 : vector<8x256xf32>
    %35 = arith.truncf %34 : vector<8x256xf32> to vector<8x256xbf16>
    %c0_12 = arith.constant 0 : index
    %c0_13 = arith.constant 0 : index
    %36 = vector.load %arg6[%c0_12, %c0_13] : memref<256x256xf32, #tpu.memory_space<vmem>>, vector<256x256xf32>
    %37 = arith.truncf %36 : vector<256x256xf32> to vector<256x256xbf16>
    %cst_14 = arith.constant dense<0.000000e+00> : vector<8x256xf32>
    %38 = tpu.matmul %35, %37, %cst_14 {dimension_numbers = #tpu.dot_dimension_numbers<[1], [0], [0], [1], [0, 0, 1, 1], [], []>} : vector<8x256xbf16>, vector<256x256xbf16>, vector<8x256xf32> -> vector<8x256xf32>
    %c0_15 = arith.constant 0 : index
    %c0_16 = arith.constant 0 : index
    %39 = vector.load %arg7[%c0_15, %c0_16] : memref<1x256xf32, #tpu.memory_space<vmem>>, vector<1x256xf32>
    %40 = vector.broadcast %39 : vector<1x256xf32> to vector<8x256xf32>
    %41 = arith.addf %38, %40 : vector<8x256xf32>
    %cst_17 = arith.constant 0.000000e+00 : f32
    %42 = vector.broadcast %cst_17 : f32 to vector<8x256xf32>
    %43 = arith.maximumf %41, %42 : vector<8x256xf32>
    %c0_18 = arith.constant 0 : index
    %c0_19 = arith.constant 0 : index
    %44 = vector.load %arg8[%c0_18, %c0_19] : memref<1x256xf32, #tpu.memory_space<vmem>>, vector<1x256xf32>
    %45 = vector.broadcast %44 : vector<1x256xf32> to vector<8x256xf32>
    %46 = arith.mulf %43, %45 : vector<8x256xf32>
    %cst_20 = arith.constant dense<0.000000e+00> : vector<8xf32>
    %47 = vector.multi_reduction <add>, %46, %cst_20 [1] : vector<8x256xf32> to vector<8xf32>
    %48 = vector.shape_cast %47 : vector<8xf32> to vector<8x1xf32>
    %c0_21 = arith.constant 0 : index
    %c0_22 = arith.constant 0 : index
    %49 = vector.load %arg9[%c0_21, %c0_22] : memref<1x1xf32, #tpu.memory_space<vmem>>, vector<1x1xf32>
    %50 = vector.broadcast %49 : vector<1x1xf32> to vector<8x1xf32>
    %51 = arith.addf %48, %50 : vector<8x1xf32>
    %c0_23 = arith.constant 0 : index
    %c0_24 = arith.constant 0 : index
    %52 = vector.load %arg10[%c0_23, %c0_24] : memref<8x1xf32, #tpu.memory_space<vmem>>, vector<8x1xf32>
    tpu.vector_store %arg10[%c0_23, %c0_24], %51 {strides = array<i32>} : memref<8x1xf32, #tpu.memory_space<vmem>>, vector<8x1xf32>,
    return
  }
  func.func @transform_0(%arg0: i32) -> (i32, i32) {
    %c0_i32 = arith.constant 0 : i32
    %c0_i32_0 = arith.constant 0 : i32
    return %arg0, %c0_i32 : i32, i32
  }
  func.func @transform_1(%arg0: i32) -> (i32, i32) {
    %c0_i32 = arith.constant 0 : i32
    %c0_i32_0 = arith.constant 0 : i32
    return %arg0, %c0_i32 : i32, i32
  }
  func.func @transform_2(%arg0: i32) -> (i32, i32) {
    %c0_i32 = arith.constant 0 : i32
    %c0_i32_0 = arith.constant 0 : i32
    %c0_i32_1 = arith.constant 0 : i32
    return %c0_i32, %c0_i32_0 : i32, i32
  }
  func.func @transform_3(%arg0: i32) -> (i32, i32) {
    %c0_i32 = arith.constant 0 : i32
    %c0_i32_0 = arith.constant 0 : i32
    %c0_i32_1 = arith.constant 0 : i32
    return %c0_i32, %c0_i32_0 : i32, i32
  }
  func.func @transform_4(%arg0: i32) -> (i32, i32) {
    %c0_i32 = arith.constant 0 : i32
    %c0_i32_0 = arith.constant 0 : i32
    %c0_i32_1 = arith.constant 0 : i32
    return %c0_i32, %c0_i32_0 : i32, i32
  }
  func.func @transform_5(%arg0: i32) -> (i32, i32) {
    %c0_i32 = arith.constant 0 : i32
    %c0_i32_0 = arith.constant 0 : i32
    %c0_i32_1 = arith.constant 0 : i32
    return %c0_i32, %c0_i32_0 : i32, i32
  }
  func.func @transform_6(%arg0: i32) -> (i32, i32) {
    %c0_i32 = arith.constant 0 : i32
    %c0_i32_0 = arith.constant 0 : i32
    %c0_i32_1 = arith.constant 0 : i32
    return %c0_i32, %c0_i32_0 : i32, i32
  }
  func.func @transform_7(%arg0: i32) -> (i32, i32) {
    %c0_i32 = arith.constant 0 : i32
    %c0_i32_0 = arith.constant 0 : i32
    %c0_i32_1 = arith.constant 0 : i32
    return %c0_i32, %c0_i32_0 : i32, i32
  }
  func.func @transform_8(%arg0: i32) -> (i32, i32) {
    %c0_i32 = arith.constant 0 : i32
    %c0_i32_0 = arith.constant 0 : i32
    %c0_i32_1 = arith.constant 0 : i32
    return %c0_i32, %c0_i32_0 : i32, i32
  }
  func.func @transform_9(%arg0: i32) -> (i32, i32) {
    %c0_i32 = arith.constant 0 : i32
    %c0_i32_0 = arith.constant 0 : i32
    return %arg0, %c0_i32 : i32, i32
  }
}

</mosaic_0001>

<llo_original>
// kernel: tpu_custom_call.1
$region0: #{tpu_custom_call.1}
  #allocation0 [shape = 'u32[]', space=smem, size = 0x4, offset = 0x4, fixed_abs, tag = 'smem constant byte address 0x4 - core index']
  #allocation1 [shape = 'u32[72,128]{1,0:T(1,128)}', space=vmem, size = 0x9000, scoped, tag = 'internal scratch']
  #allocation2 [shape = 'f32[1,1]{1,0:T(1,128)S(1)}', space=vmem, size = 0x200, scoped, tag = 'scoped memory for tpu_custom_call.1']
  %s0 = inlined_call_operand.vmem [shape: f32[8,4], index: 0, kind: input, shape index: {}]
  %s1 = inlined_call_operand.vmem [shape: f32[8,1], index: 1, kind: input, shape index: {}]
  %s2 = inlined_call_operand.vmem [shape: f32[4,256], index: 2, kind: input, shape index: {}]
  %s3 = inlined_call_operand.vmem [shape: f32[1,256], index: 3, kind: input, shape index: {}]
  %s4 = inlined_call_operand.vmem [shape: f32[1,256], index: 4, kind: input, shape index: {}]
  %s5 = inlined_call_operand.hbm [shape: f32[256,256], index: 5, kind: input, shape index: {}]
  %s6 = inlined_call_operand.vmem [shape: f32[1,256], index: 6, kind: input, shape index: {}]
  %s7 = inlined_call_operand.vmem [shape: f32[1,256], index: 7, kind: input, shape index: {}]
  %s8 = inlined_call_operand.<no memory space> [shape: f32[1,1], index: 8, kind: input, shape index: {}]
  %s9 = inlined_call_operand.vmem [shape: f32[8,1], index: 9, kind: output, shape index: {}]
  %s10 = sld [smem:[#allocation0]]
  $region50: #{tpu_custom_call.1} parent=0
    _
  %s12 = ssub.s32 1, %s10
  %s13 = scalar_select 0, %s12, %s10
  %v14 = vstv %s8
  %15 = vst [vmem:[#allocation2] sm:$0x1] %v14
  $region1: #{tpu_custom_call.1} parent=0
    #allocation3 [shape = 'u8[262144]{0}', space=vmem, size = 0x40000, scoped, tag = 'input window, operand 5, single buffered']
    #allocation4 [shape = 's32[1]{0}', space=sflag, size = 0x4, scoped, tag = 'scoped memory for tpu_custom_call.1']
    %16 = vsyncpa [#allocation4], 0
    // Predicated region
    $region2: #{tpu_custom_call.1} parent=1 // pred_check
      _
    $region3: #{tpu_custom_call.1} parent=1 // pred_check_branch
      %18 = sbr.rel (0) target = $region5
    $region4: #{tpu_custom_call.1} parent=1 // pred_region
      _
    $region5: #{tpu_custom_call.1} parent=1 // pred_fallthru
      _
    // Predicated region
    $region6: #{tpu_custom_call.1} parent=1 // pred_check
      _
    $region7: #{tpu_custom_call.1} parent=1 // pred_check_branch
      %20 = sbr.rel (0) target = $region9
    $region8: #{tpu_custom_call.1} parent=1 // pred_region
      _
    $region9: #{tpu_custom_call.1} parent=1 // pred_fallthru
      _
    // Predicated region
    $region10: #{tpu_custom_call.1} parent=1 // pred_check
      _
    $region11: #{tpu_custom_call.1} parent=1 // pred_check_branch
      %22 = sbr.rel (0) target = $region13
    $region12: #{tpu_custom_call.1} parent=1 // pred_region
      _
    $region13: #{tpu_custom_call.1} parent=1 // pred_fallthru
      _
    // Predicated region
    $region14: #{tpu_custom_call.1} parent=1 // pred_check
      _
    $region15: #{tpu_custom_call.1} parent=1 // pred_check_branch
      %24 = sbr.rel (0) target = $region17
    $region16: #{tpu_custom_call.1} parent=1 // pred_region
      _
    $region17: #{tpu_custom_call.1} parent=1 // pred_fallthru
      _
    // Predicated region
    $region18: #{tpu_custom_call.1} parent=1 // pred_check
      _
    $region19: #{tpu_custom_call.1} parent=1 // pred_check_branch
      %26 = sbr.rel (0) target = $region21
    $region20: #{tpu_custom_call.1} parent=1 // pred_region
      _
    $region21: #{tpu_custom_call.1} parent=1 // pred_fallthru
      _
    // Predicated region
    $region22: #{tpu_custom_call.1} parent=1 // pred_check
      _
    $region23: #{tpu_custom_call.1} parent=1 // pred_check_branch
      %28 = sbr.rel (0) target = $region25
    $region24: #{tpu_custom_call.1} parent=1 // pred_region
      %30 = vsyncadd [#allocation4], 0
      %s31 = sshll.u32 %s5, 4
      %s32 = int_to_ptr.hbm [resolvable:$true] %s31
      %s33 = sshll.u32 [#allocation3], 4
      %s34 = int_to_ptr.vmem [resolvable:$true] %s33
      %39 = dma.hbm_to_vmem [thread:$0]  %s32, 8192, %s34, [#allocation4], 256, 256, 16
    $region25: #{tpu_custom_call.1} parent=1 // pred_fallthru
      _
    // Predicated region
    $region26: #{tpu_custom_call.1} parent=1 // pred_check
      _
    $region27: #{tpu_custom_call.1} parent=1 // pred_check_branch
      %41 = sbr.rel (0) target = $region29
    $region28: #{tpu_custom_call.1} parent=1 // pred_region
      _
    $region29: #{tpu_custom_call.1} parent=1 // pred_fallthru
      _
    // Predicated region
    $region30: #{tpu_custom_call.1} parent=1 // pred_check
      _
    $region31: #{tpu_custom_call.1} parent=1 // pred_check_branch
      %43 = sbr.rel (0) target = $region33
    $region32: #{tpu_custom_call.1} parent=1 // pred_region
      _
    $region33: #{tpu_custom_call.1} parent=1 // pred_fallthru
      _
    // Predicated region
    $region34: #{tpu_custom_call.1} parent=1 // pred_check
      _
    $region35: #{tpu_custom_call.1} parent=1 // pred_check_branch
      %45 = sbr.rel (0) target = $region37
    $region36: #{tpu_custom_call.1} parent=1 // pred_region
      _
    $region37: #{tpu_custom_call.1} parent=1 // pred_fallthru
      _
    // Predicated region
    $region38: #{tpu_custom_call.1} parent=1 // pred_check
      _
    $region39: #{tpu_custom_call.1} parent=1 // pred_check_branch
      %47 = sbr.rel (0) target = $region41
    $region40: #{tpu_custom_call.1} parent=1 // pred_region
      %49 = dma.done [#allocation4], 8192
    $region41: #{tpu_custom_call.1} parent=1 // pred_fallthru
      _
    %v50 = vld [vmem:[%s0] sm:$0xff]
    %v51 = vld [vmem:[%s1] sm:$0xff]
    %v52 = vld [vmem:[%s4] sm:$0x3]
    %v53 = vld [vmem:[%s2] ss:$4 sm:$0x3]
    %55 = vset.pattern.permute.xlu0 0
    %56 = vperm.xlu0 %55, %v50
    %v57 = vpop.permute.xlu0 %56
    %v60 = vperm.slane %v53, 0
    %v61 = vperm.slane %v53, 1
    %v64 = vmul.f32 %v57, %v60
    %v65 = vmul.f32 %v57, %v61
    %v67 = vperm.slane %v52, 0
    %v68 = vperm.slane %v52, 1
    %v71 = vadd.f32 %v67, %v64
    %v72 = vadd.f32 %v68, %v65
    %s73 = scalar_lea.vmem %s2, 1
    %v74 = vld [vmem:[%s73] ss:$4 sm:$0x3]
    %75 = vset.pattern.permute.xlu0 1
    %76 = vperm.xlu0 %75, %v50
    %v77 = vpop.permute.xlu0 %76
    %v80 = vperm.slane %v74, 0
    %v81 = vperm.slane %v74, 1
    %v84 = vmul.f32 %v77, %v80
    %v85 = vmul.f32 %v77, %v81
    %v86 = vadd.f32 %v71, %v84
    %v87 = vadd.f32 %v72, %v85
    %s88 = scalar_lea.vmem %s2, 2
    %v89 = vld [vmem:[%s88] ss:$4 sm:$0x3]
    %90 = vset.pattern.permute.xlu0 2
    %91 = vperm.xlu0 %90, %v50
    %v92 = vpop.permute.xlu0 %91
    %v95 = vperm.slane %v89, 0
    %v96 = vperm.slane %v89, 1
    %v99 = vmul.f32 %v92, %v95
    %v100 = vmul.f32 %v92, %v96
    %v101 = vadd.f32 %v86, %v99
    %v102 = vadd.f32 %v87, %v100
    %s103 = scalar_lea.vmem %s2, 3
    %v104 = vld [vmem:[%s103] ss:$4 sm:$0x3]
    %105 = vset.pattern.permute.xlu0 3
    %106 = vperm.xlu0 %105, %v50
    %v107 = vpop.permute.xlu0 %106
    %v110 = vperm.slane %v104, 0
    %v111 = vperm.slane %v104, 1
    %v114 = vmul.f32 %v107, %v110
    %v115 = vmul.f32 %v107, %v111
    %v116 = vadd.f32 %v101, %v114
    %v117 = vadd.f32 %v102, %v115
    %v118 = vld [vmem:[%s3] sm:$0x3]
    %120 = vset.pattern.permute.xlu0 0
    %121 = vperm.xlu0 %120, %v51
    %v122 = vpop.permute.xlu0 %121
    %v125 = vperm.slane %v118, 0
    %v126 = vperm.slane %v118, 1
    %v129 = vmul.f32 %v122, %v125
    %v130 = vmul.f32 %v122, %v126
    %v131 = vadd.f32 %v116, %v129
    %v132 = vadd.f32 %v117, %v130
    %v133 = vmax.f32 %v131, 0.0
    %v134 = vmax.f32 %v132, 0.0
    %v135 = vpack.c.bf16 %v133, %v133
    %v136 = vpack.c.bf16 %v134, %v134
    %v137 = vld [vmem:[#allocation3] sm:$0xff]
    %v138 = vld [vmem:[#allocation3 + $0x8] sm:$0xff]
    %v139 = vld [vmem:[#allocation3 + $0x10] sm:$0xff]
    %v140 = vld [vmem:[#allocation3 + $0x18] sm:$0xff]
    %v141 = vld [vmem:[#allocation3 + $0x20] sm:$0xff]
    %v142 = vld [vmem:[#allocation3 + $0x28] sm:$0xff]
    %v143 = vld [vmem:[#allocation3 + $0x30] sm:$0xff]
    %v144 = vld [vmem:[#allocation3 + $0x38] sm:$0xff]
    %v145 = vld [vmem:[#allocation3 + $0x40] sm:$0xff]
    %v146 = vld [vmem:[#allocation3 + $0x48] sm:$0xff]
    %v147 = vld [vmem:[#allocation3 + $0x50] sm:$0xff]
    %v148 = vld [vmem:[#allocation3 + $0x58] sm:$0xff]
    %v149 = vld [vmem:[#allocation3 + $0x60] sm:$0xff]
    %v150 = vld [vmem:[#allocation3 + $0x68] sm:$0xff]
    %v151 = vld [vmem:[#allocation3 + $0x70] sm:$0xff]
    %v152 = vld [vmem:[#allocation3 + $0x78] sm:$0xff]
    %v153 = vld [vmem:[#allocation3 + $0x80] sm:$0xff]
    %v154 = vld [vmem:[#allocation3 + $0x88] sm:$0xff]
    %v155 = vld [vmem:[#allocation3 + $0x90] sm:$0xff]
    %v156 = vld [vmem:[#allocation3 + $0x98] sm:$0xff]
    %v157 = vld [vmem:[#allocation3 + $0xa0] sm:$0xff]
    %v158 = vld [vmem:[#allocation3 + $0xa8] sm:$0xff]
    %v159 = vld [vmem:[#allocation3 + $0xb0] sm:$0xff]
    %v160 = vld [vmem:[#allocation3 + $0xb8] sm:$0xff]
    %v161 = vld [vmem:[#allocation3 + $0xc0] sm:$0xff]
    %v162 = vld [vmem:[#allocation3 + $0xc8] sm:$0xff]
    %v163 = vld [vmem:[#allocation3 + $0xd0] sm:$0xff]
    %v164 = vld [vmem:[#allocation3 + $0xd8] sm:$0xff]
    %v165 = vld [vmem:[#allocation3 + $0xe0] sm:$0xff]
    %v166 = vld [vmem:[#allocation3 + $0xe8] sm:$0xff]
    %v167 = vld [vmem:[#allocation3 + $0xf0] sm:$0xff]
    %v168 = vld [vmem:[#allocation3 + $0xf8] sm:$0xff]
    %v169 = vld [vmem:[#allocation3 + $0x100] sm:$0xff]
    %v170 = vld [vmem:[#allocation3 + $0x108] sm:$0xff]
    %v171 = vld [vmem:[#allocation3 + $0x110] sm:$0xff]
    %v172 = vld [vmem:[#allocation3 + $0x118] sm:$0xff]
    %v173 = vld [vmem:[#allocation3 + $0x120] sm:$0xff]
    %v174 = vld [vmem:[#allocation3 + $0x128] sm:$0xff]
    %v175 = vld [vmem:[#allocation3 + $0x130] sm:$0xff]
    %v176 = vld [vmem:[#allocation3 + $0x138] sm:$0xff]
    %v177 = vld [vmem:[#allocation3 + $0x140] sm:$0xff]
    %v178 = vld [vmem:[#allocation3 + $0x148] sm:$0xff]
    %v179 = vld [vmem:[#allocation3 + $0x150] sm:$0xff]
    %v180 = vld [vmem:[#allocation3 + $0x158] sm:$0xff]
    %v181 = vld [vmem:[#allocation3 + $0x160] sm:$0xff]
    %v182 = vld [vmem:[#allocation3 + $0x168] sm:$0xff]
    %v183 = vld [vmem:[#allocation3 + $0x170] sm:$0xff]
    %v184 = vld [vmem:[#allocation3 + $0x178] sm:$0xff]
    %v185 = vld [vmem:[#allocation3 + $0x180] sm:$0xff]
    %v186 = vld [vmem:[#allocation3 + $0x188] sm:$0xff]
    %v187 = vld [vmem:[#allocation3 + $0x190] sm:$0xff]
    %v188 = vld [vmem:[#allocation3 + $0x198] sm:$0xff]
    %v189 = vld [vmem:[#allocation3 + $0x1a0] sm:$0xff]
    %v190 = vld [vmem:[#allocation3 + $0x1a8] sm:$0xff]
    %v191 = vld [vmem:[#allocation3 + $0x1b0] sm:$0xff]
    %v192 = vld [vmem:[#allocation3 + $0x1b8] sm:$0xff]
    %v193 = vld [vmem:[#allocation3 + $0x1c0] sm:$0xff]
    %v194 = vld [vmem:[#allocation3 + $0x1c8] sm:$0xff]
    %v195 = vld [vmem:[#allocation3 + $0x1d0] sm:$0xff]
    %v196 = vld [vmem:[#allocation3 + $0x1d8] sm:$0xff]
    %v197 = vld [vmem:[#allocation3 + $0x1e0] sm:$0xff]
    %v198 = vld [vmem:[#allocation3 + $0x1e8] sm:$0xff]
    %v199 = vld [vmem:[#allocation3 + $0x1f0] sm:$0xff]
    %v200 = vld [vmem:[#allocation3 + $0x1f8] sm:$0xff]
    %v201 = vpack.c.bf16 %v139, %v137
    %v202 = vpack.c.bf16 %v140, %v138
    %v203 = vpack.c.bf16 %v143, %v141
    %v204 = vpack.c.bf16 %v144, %v142
    %v205 = vpack.c.bf16 %v147, %v145
    %v206 = vpack.c.bf16 %v148, %v146
    %v207 = vpack.c.bf16 %v151, %v149
    %v208 = vpack.c.bf16 %v152, %v150
    %v209 = vpack.c.bf16 %v155, %v153
    %v210 = vpack.c.bf16 %v156, %v154
    %v211 = vpack.c.bf16 %v159, %v157
    %v212 = vpack.c.bf16 %v160, %v158
    %v213 = vpack.c.bf16 %v163, %v161
    %v214 = vpack.c.bf16 %v164, %v162
    %v215 = vpack.c.bf16 %v167, %v165
    %v216 = vpack.c.bf16 %v168, %v166
    %v217 = vpack.c.bf16 %v171, %v169
    %v218 = vpack.c.bf16 %v172, %v170
    %v219 = vpack.c.bf16 %v175, %v173
    %v220 = vpack.c.bf16 %v176, %v174
    %v221 = vpack.c.bf16 %v179, %v177
    %v222 = vpack.c.bf16 %v180, %v178
    %v223 = vpack.c.bf16 %v183, %v181
    %v224 = vpack.c.bf16 %v184, %v182
    %v225 = vpack.c.bf16 %v187, %v185
    %v226 = vpack.c.bf16 %v188, %v186
    %v227 = vpack.c.bf16 %v191, %v189
    %v228 = vpack.c.bf16 %v192, %v190
    %v229 = vpack.c.bf16 %v195, %v193
    %v230 = vpack.c.bf16 %v196, %v194
    %v231 = vpack.c.bf16 %v199, %v197
    %v232 = vpack.c.bf16 %v200, %v198
    %v233 = vld [vmem:[%s6] sm:$0x3]
    %v235 = vperm.slane %v233, 0
    %v236 = vperm.slane %v233, 1
    %239 = vmatpush.bf16.msra.mxu0 %v215
    %240 = vmatpush.bf16.msra.mxu0 %v213
    %241 = vmatpush.bf16.msra.mxu0 %v211
    %242 = vmatpush.bf16.msra.mxu0 %v209
    %243 = vmatpush.bf16.msra.mxu0 %v207
    %244 = vmatpush.bf16.msra.mxu0 %v205
    %245 = vmatpush.bf16.msra.mxu0 %v203
    %246 = vmatpush.bf16.msra.mxu0 %v201
    %247 = vmatmul.bf16.gmra.mxu0 %v135
    %v248 = vpop.f32.mrf.mxu0
    %v249 = vadd.f32 %v235, %v248
    %v250 = vpop.f32.mrf.mxu0
    %251 = vdwg.mxu0
    %252 = vmatpush.bf16.msra.mxu0 %v231
    %253 = vmatpush.bf16.msra.mxu0 %v229
    %254 = vmatpush.bf16.msra.mxu0 %v227
    %255 = vmatpush.bf16.msra.mxu0 %v225
    %256 = vmatpush.bf16.msra.mxu0 %v223
    %257 = vmatpush.bf16.msra.mxu0 %v221
    %258 = vmatpush.bf16.msra.mxu0 %v219
    %259 = vmatpush.bf16.msra.mxu0 %v217
    %260 = vmatmul.bf16.gmra.mxu0 %v136
    %v261 = vpop.f32.mrf.mxu0
    %v262 = vadd.f32 %v249, %v261
    %v263 = vpop.f32.mrf.mxu0
    %264 = vdwg.mxu0
    %265 = vmatpush.bf16.msra.mxu0 %v216
    %266 = vmatpush.bf16.msra.mxu0 %v214
    %267 = vmatpush.bf16.msra.mxu0 %v212
    %268 = vmatpush.bf16.msra.mxu0 %v210
    %269 = vmatpush.bf16.msra.mxu0 %v208
    %270 = vmatpush.bf16.msra.mxu0 %v206
    %271 = vmatpush.bf16.msra.mxu0 %v204
    %272 = vmatpush.bf16.msra.mxu0 %v202
    %273 = vmatmul.bf16.gmra.mxu0 %v135
    %v274 = vpop.f32.mrf.mxu0
    %v275 = vadd.f32 %v236, %v274
    %v276 = vpop.f32.mrf.mxu0
    %277 = vdwg.mxu0
    %278 = vmatpush.bf16.msra.mxu0 %v232
    %279 = vmatpush.bf16.msra.mxu0 %v230
    %280 = vmatpush.bf16.msra.mxu0 %v228
    %281 = vmatpush.bf16.msra.mxu0 %v226
    %282 = vmatpush.bf16.msra.mxu0 %v224
    %283 = vmatpush.bf16.msra.mxu0 %v222
    %284 = vmatpush.bf16.msra.mxu0 %v220
    %285 = vmatpush.bf16.msra.mxu0 %v218
    %286 = vmatmul.bf16.gmra.mxu0 %v136
    %v287 = vpop.f32.mrf.mxu0
    %v288 = vadd.f32 %v275, %v287
    %v289 = vpop.f32.mrf.mxu0
    %290 = vdwg.mxu0
    %v291 = vmax.f32 %v262, 0.0
    %v292 = vmax.f32 %v288, 0.0
    %v293 = vld [vmem:[%s7] sm:$0x3]
    %v295 = vperm.slane %v293, 0
    %v296 = vperm.slane %v293, 1
    %v299 = vmul.f32 %v291, %v295
    %v300 = vmul.f32 %v292, %v296
    %v301 = vadd.f32 %v299, %v300
    %302 = vadd.xlane.f32.xlu0 %v301
    %v303 = vpop.xlane.xlu0 %302
    %v304 = vld [vmem:[#allocation2] sm:$0x1]
    %v306 = vperm.slane %v304, 0
    %v308 = vadd.f32 %v303, %v306
    %vm309 = vcmask 7168
    %310 = vst.msk [vmem:[%s9] sm:$0xff] %vm309, %v308
    // Predicated region
    $region42: #{tpu_custom_call.1} parent=1 // pred_check
      _
    $region43: #{tpu_custom_call.1} parent=1 // pred_check_branch
      %312 = sbr.rel (0) target = $region45
    $region44: #{tpu_custom_call.1} parent=1 // pred_region
      _
    $region45: #{tpu_custom_call.1} parent=1 // pred_fallthru
      _
    // Predicated region
    $region46: #{tpu_custom_call.1} parent=1 // pred_check
      _
    $region47: #{tpu_custom_call.1} parent=1 // pred_check_branch
      %314 = sbr.rel (0) target = $region49
    $region48: #{tpu_custom_call.1} parent=1 // pred_region
      _
    $region49: #{tpu_custom_call.1} parent=1 // pred_fallthru
      _
    %315 = vsyncpa [#allocation4], 1

</llo_original>
